<compile_context>
chip_gen: v5e
topology: v5e:2x2
jax: 0.10.0
libtpu: 0.0.40
codegen_flags: <defaults>
</compile_context>

<pallas_src>
import jax
import jax.numpy as jnp
from jax.experimental import pallas as pl
from jax.experimental.pallas import tpu as pltpu

SEQ_LEN = 8      # config.seq_len  (residue axis)
D_MODEL = 32     # config.d_model


def _pos_embed_kernel(w_ref, o_ref):
    # w_ref: (1, residue*d_model) VMEM — flattened W_pos; constant index_map,
    #        so it is fetched once and stays VMEM-resident across grid steps.
    # o_ref: (ts, residue*d_model) VMEM — current block of `sequence` rows.
    # Sublane-broadcast of one lane-dense row; last dim (256 here) is a
    # multiple of 128, so stores are full unmasked vst and write-back DMAs are
    # dense.
    o_ref[...] = jnp.broadcast_to(w_ref[...], o_ref.shape)


def positional_embedding(seqs: jax.Array, w_pos: jax.Array) -> jax.Array:
    assert seqs.ndim == 2
    sequence, residue = seqs.shape
    assert residue == w_pos.shape[0]
    d_model = w_pos.shape[1]
    dtype = w_pos.dtype
    itemsize = dtype.itemsize

    # Lane-dense layout: (residue*d_model) = 256 here, a multiple of 128.
    # Row-major contiguous reshape -> free.
    flat = residue * d_model
    w_flat = w_pos.reshape(1, flat)

    # --- tile-size selection -------------------------------------------------
    # One grid step writes ts * flat * itemsize bytes.  Cap each output buffer
    # at 4 MiB (double-buffered -> 8 MiB) so it fits every generation's default
    # scoped VMEM with headroom.  Re-derive vs v7x (64 MiB physical) if raised.
    bytes_per_row = flat * itemsize
    max_tile_bytes = 4 * 1024 * 1024
    ts_cap = max(8, (max_tile_bytes // bytes_per_row) // 8 * 8)

    if sequence < 16:
        # Too small for two 8-row sublane tiles: single block whose first dim
        # equals the full array dim (always a legal block shape).
        ts = sequence
    else:
        # Even number of balanced, 8-aligned blocks so the "parallel" sequence
        # axis splits evenly across v7x's two TensorCores; on v5e/v6e the extra
        # grid steps only cost ~0.35us each and stay well amortized.
        nblk = max(2, pl.cdiv(sequence, ts_cap))
        if nblk % 2:
            nblk += 1
        ts = min(ts_cap, (pl.cdiv(sequence, nblk) + 7) // 8 * 8)

    grid = (pl.cdiv(sequence, ts),)

    out_flat = pl.pallas_call(
        _pos_embed_kernel,
        out_shape=jax.ShapeDtypeStruct((sequence, flat), dtype),
        grid=grid,
        in_specs=[
            # Full flattened W_pos; same (0, 0) block every grid step.
            pl.BlockSpec((1, flat), lambda s: (0, 0)),
        ],
        out_specs=pl.BlockSpec((ts, flat), lambda s: (s, 0)),
        compiler_params=pltpu.CompilerParams(
            dimension_semantics=("parallel",),
        ),
        # Pure-HBM-bandwidth op: advise XLA's scheduler accordingly.
        cost_estimate=pl.CostEstimate(
            flops=0,
            transcendentals=0,
            bytes_accessed=(sequence * flat + flat) * itemsize,
        ),
    )(w_flat)

    result = out_flat.reshape(sequence, residue, d_model)
    assert result.shape == (sequence, residue, d_model)
    return result


if __name__ == "__main__":
    key = jax.random.PRNGKey(0)
    k_w, k_s, k_s2 = jax.random.split(key, 3)

    # Deterministic parameter init: uniform(-1, 1), matching nn.init.uniform_(..., -1, 1)
    w_pos = jax.random.uniform(
        k_w, (SEQ_LEN, D_MODEL), dtype=jnp.float32, minval=-1.0, maxval=1.0
    )

    # Example integer token sequences: (sequence=2, residue=SEQ_LEN)
    seqs = jax.random.randint(k_s, (2, SEQ_LEN), 0, 20, dtype=jnp.int32)

    result = positional_embedding(seqs, w_pos)
    result = jax.block_until_ready(result)

    expected = jnp.broadcast_to(w_pos[None, :, :], (seqs.shape[0], SEQ_LEN, D_MODEL))
    assert result.shape == (seqs.shape[0], seqs.shape[1], D_MODEL)
    assert jnp.array_equal(result, expected)

    # Second check: multi-block path with a remainder block (sequence=37 ->
    # two 8-aligned blocks, last one partial), exercising output masking and
    # the 2-block parallel split.
    seqs_big = jax.random.randint(k_s2, (37, SEQ_LEN), 0, 20, dtype=jnp.int32)
    result_big = jax.block_until_ready(positional_embedding(seqs_big, w_pos))
    expected_big = jnp.broadcast_to(w_pos[None, :, :], (37, SEQ_LEN, D_MODEL))
    assert result_big.shape == (37, SEQ_LEN, D_MODEL)
    assert jnp.array_equal(result_big, expected_big)

    print("KERNEL_OK")
</pallas_src>

<mosaic_0001>
module attributes {stable_mosaic.version = 11 : i64} {
  func.func @_pos_embed_kernel(%arg0: i32, %arg1: memref<1x256xf32, #tpu.memory_space<vmem>>, %arg2: memref<2x256xf32, #tpu.memory_space<vmem>>) attributes {dimension_semantics = [#tpu.dimension_semantics<parallel>], iteration_bounds = array<i64: 1>, scalar_prefetch = 0 : i64, scratch_operands = 0 : i64, tpu.core_type = #tpu.core_type<tc>, window_params = [{pipeline_mode = #tpu.pipeline_mode<synchronous>, transform_indices = @transform_0, window_bounds = array<i64: 1, 256>}, {transform_indices = @transform_1, window_bounds = array<i64: 2, 256>}]} {
    %c0 = arith.constant 0 : index
    %c0_0 = arith.constant 0 : index
    %0 = vector.load %arg1[%c0, %c0_0] : memref<1x256xf32, #tpu.memory_space<vmem>>, vector<1x256xf32>
    %1 = vector.shape_cast %0 : vector<1x256xf32> to vector<1x256xf32>
    %2 = vector.broadcast %1 : vector<1x256xf32> to vector<2x256xf32>
    %c0_1 = arith.constant 0 : index
    %c0_2 = arith.constant 0 : index
    %3 = vector.load %arg2[%c0_1, %c0_2] : memref<2x256xf32, #tpu.memory_space<vmem>>, vector<2x256xf32>
    tpu.vector_store %arg2[%c0_1, %c0_2], %2 {strides = array<i32>} : memref<2x256xf32, #tpu.memory_space<vmem>>, vector<2x256xf32>,
    return
  }
  func.func @transform_0(%arg0: i32) -> (i32, i32) {
    %c0_i32 = arith.constant 0 : i32
    %c0_i32_0 = arith.constant 0 : i32
    %c0_i32_1 = arith.constant 0 : i32
    return %c0_i32, %c0_i32_0 : i32, i32
  }
  func.func @transform_1(%arg0: i32) -> (i32, i32) {
    %c0_i32 = arith.constant 0 : i32
    %c0_i32_0 = arith.constant 0 : i32
    return %arg0, %c0_i32 : i32, i32
  }
}

</mosaic_0001>

<llo_original>
// kernel: tpu_custom_call.1
$region0: #{tpu_custom_call.1}
  #allocation0 [shape = 'u32[]', space=smem, size = 0x4, offset = 0x4, fixed_abs, tag = 'smem constant byte address 0x4 - core index']
  #allocation1 [shape = 'u32[72,128]{1,0:T(1,128)}', space=vmem, size = 0x9000, scoped, tag = 'internal scratch']
  %s0 = inlined_call_operand.hbm [shape: f32[1,256], index: 0, kind: input, shape index: {}]
  %s1 = inlined_call_operand.hbm [shape: f32[2,256], index: 1, kind: output, shape index: {}]
  %s2 = sld [smem:[#allocation0]]
  $region18: #{tpu_custom_call.1} parent=0
    _
  %s4 = ssub.s32 1, %s2
  %s5 = scalar_select 0, %s4, %s2
  $region1: #{tpu_custom_call.1} parent=0
    #allocation2 [shape = 'u8[1024]{0}', space=vmem, size = 0x400, scoped, tag = 'input window, operand 0, single buffered']
    #allocation3 [shape = 's32[1]{0}', space=sflag, size = 0x4, scoped, tag = 'scoped memory for tpu_custom_call.1']
    #allocation4 [shape = 's32[1]{0}', space=sflag, size = 0x4, scoped, tag = 'scoped memory for tpu_custom_call.1']
    #allocation5 [shape = 'u8[2048]{0}', space=vmem, size = 0x800, scoped, tag = 'output window, operand 0, single buffered']
    %6 = vsyncpa [#allocation3], 0
    %7 = vsyncpa [#allocation4], 0
    // Predicated region
    $region2: #{tpu_custom_call.1} parent=1 // pred_check
      _
    $region3: #{tpu_custom_call.1} parent=1 // pred_check_branch
      %9 = sbr.rel (0) target = $region5
    $region4: #{tpu_custom_call.1} parent=1 // pred_region
      %11 = vsyncadd [#allocation3], 0
      %s13 = sshll.u32 %s0, 4
      %s14 = int_to_ptr.hbm [resolvable:$true] %s13
      %s15 = sshll.u32 [#allocation2], 4
      %s16 = int_to_ptr.vmem [resolvable:$true] %s15
      %18 = dma.hbm_to_vmem [thread:$0]  %s14, 32, %s16, [#allocation3]
    $region5: #{tpu_custom_call.1} parent=1 // pred_fallthru
      _
    // Predicated region
    $region6: #{tpu_custom_call.1} parent=1 // pred_check
      _
    $region7: #{tpu_custom_call.1} parent=1 // pred_check_branch
      %20 = sbr.rel (0) target = $region9
    $region8: #{tpu_custom_call.1} parent=1 // pred_region
      %22 = dma.done [#allocation3], 32
    $region9: #{tpu_custom_call.1} parent=1 // pred_fallthru
      _
    %v23 = vld [vmem:[#allocation2] sm:$0x3]
    %v25 = vperm.slane %v23, 0
    %v26 = vperm.slane %v23, 1
    %v27 = vrot.slane %v26, 6
    %vm28 = vcmask 1041408
    %v29 = vsel %vm28, %v25, %v27
    %31 = vst [vmem:[#allocation5] sm:$0xf] %v29
    // Predicated region
    $region10: #{tpu_custom_call.1} parent=1 // pred_check
      _
    $region11: #{tpu_custom_call.1} parent=1 // pred_check_branch
      %33 = sbr.rel (0) target = $region13
    $region12: #{tpu_custom_call.1} parent=1 // pred_region
      %35 = vsyncadd [#allocation4], 0
      %s37 = sshll.u32 [#allocation5], 4
      %s38 = int_to_ptr.vmem [resolvable:$true] %s37
      %s39 = sshll.u32 %s1, 4
      %s40 = int_to_ptr.hbm [resolvable:$true] %s39
      %42 = dma.vmem_to_hbm [thread:$0]  %s38, 64, %s40, [#allocation4]
    $region13: #{tpu_custom_call.1} parent=1 // pred_fallthru
      _
    // Predicated region
    $region14: #{tpu_custom_call.1} parent=1 // pred_check
      _
    $region15: #{tpu_custom_call.1} parent=1 // pred_check_branch
      %44 = sbr.rel (0) target = $region17
    $region16: #{tpu_custom_call.1} parent=1 // pred_region
      %46 = dma.done [#allocation4], 64
    $region17: #{tpu_custom_call.1} parent=1 // pred_fallthru
      _
    %47 = vsyncpa [#allocation3], 1
    %48 = vsyncpa [#allocation4], 1

</llo_original>
